<compile_context>
chip_gen: v6e
topology: v6e:2x2x1
jax: 0.10.0
libtpu: 0.0.40
codegen_flags: <defaults>
</compile_context>

<pallas_src>
import functools

import jax
import jax.numpy as jnp
from jax import lax
from jax.experimental import pallas as pl
from jax.experimental.pallas import tpu as pltpu


def _default_compute_dtype():
    """bf16 VPU/EUP paths exist on v6e/v7x; keep f32 on v5e and older.

    NOTE: this makes the *default* numerics generation-dependent (bf16 tanh
    and MXU operands on v6e/v7x, exact f32 elsewhere).  Pass compute_dtype
    explicitly if identical results across generations are required.
    """
    try:
        kind = jax.devices()[0].device_kind.lower()
    except Exception:
        return jnp.float32
    for old in ("v2", "v3", "v4", "v5"):
        if old in kind:
            return jnp.float32
    return jnp.bfloat16


def _round_up(x, m):
    return ((x + m - 1) // m) * m


def _hdnn_kernel(x_ref, w1t_ref, b1_ref, w2_ref, b2_ref, w3_ref, b3_ref,
                 out_ref, *, chunk, n_chunks):
    """Fused 3-layer MLP in [features, batch_tile] layout.

    x_ref   : (1, block_cols)   t values, batch on the lane axis      f32
    w1t_ref : (D_hid, 1)        W1[:, 0]  (the `t` column)            act dtype
    b1_ref  : (D_hid, 1)        b1 + kappa * W1[:, 1]                 act dtype
    w2_ref  : (D_hid, D_hid)    W2 in PyTorch [out, in] layout        mxu dtype
    b2_ref  : (D_hid, 1)                                              f32
    w3_ref  : (outn, D_hid)     W3 in PyTorch [out, in] layout        mxu dtype
    b3_ref  : (outn, 1)                                               f32
    out_ref : (outn, block_cols)                                      f32

    The tile is processed in `n_chunks` lane sub-chunks of width `chunk`
    (block_cols == n_chunks * chunk) so inter-layer temporaries stay at
    vreg scale instead of bouncing through VMEM.
    """
    act_dt = w1t_ref.dtype   # tanh / layer-1 VPU dtype
    mxu_dt = w2_ref.dtype    # MXU operand dtype (accumulation is always f32)

    w1t = w1t_ref[...]
    b1 = b1_ref[...]
    w2 = w2_ref[...]
    b2 = b2_ref[...]
    w3 = w3_ref[...]
    b3 = b3_ref[...]

    def mlp(x):
        # Layer 1: K=1 contraction -> VPU broadcast-FMA, entirely in act_dt.
        # jnp.tanh lowers to the native EUP tanh op (single vector-ext push).
        h = jnp.tanh(w1t * x.astype(act_dt) + b1)                     # (D, c)
        # Layer 2: MXU, f32 accumulation, f32 bias add, tanh in act_dt.
        p = jnp.dot(w2, h.astype(mxu_dt),
                    preferred_element_type=jnp.float32) + b2          # (D, c) f32
        h = jnp.tanh(p.astype(act_dt))
        # Layer 3: MXU, f32 accumulation + f32 bias; lane-dense f32 result.
        return jnp.dot(w3, h.astype(mxu_dt),
                       preferred_element_type=jnp.float32) + b3       # (O, c) f32

    if n_chunks == 1:
        out_ref[...] = mlp(x_ref[...]).astype(out_ref.dtype)
    else:
        def body(c, carry):
            j = pl.multiple_of(c * chunk, chunk)
            out_ref[:, pl.ds(j, chunk)] = (
                mlp(x_ref[:, pl.ds(j, chunk)]).astype(out_ref.dtype))
            return carry

        lax.fori_loop(0, n_chunks, body, 0, unroll=True)


def hdnn_forward(t, kappa, params, *, block_cols=None, compute_dtype=None,
                 mxu_dtype=None):
    """Pallas-backed HDNN forward.

    t:      (N, 1) float32 (or (N,))
    kappa:  scalar
    params: PyTorch-convention shapes:
            W1 (D_hid, 2), b1 (D_hid,)
            W2 (D_hid, D_hid), b2 (D_hid,)
            W3 (outn, D_hid),  b3 (outn,)
    compute_dtype: dtype for tanh / layer-1 VPU math.  None -> bf16 on
            v6e/v7x, f32 on v5e and older (default numerics are therefore
            generation-dependent; pass jnp.float32 for exact results).
    mxu_dtype: dtype of the MXU operands for layers 2/3 (accumulation is
            always f32).  None -> same as compute_dtype.  On v5e you may pass
            jnp.bfloat16 here while keeping compute_dtype=jnp.float32.
    Returns a list of (N, 1) float32 arrays, one per output column
    (matching the torch module's return convention).
    """
    t = jnp.asarray(t, jnp.float32)
    if t.ndim == 1:
        t = t.reshape(-1, 1)
    N = t.shape[0]

    W1 = jnp.asarray(params["W1"], jnp.float32)
    b1 = jnp.asarray(params["b1"], jnp.float32)
    W2 = jnp.asarray(params["W2"], jnp.float32)
    b2 = jnp.asarray(params["b2"], jnp.float32)
    W3 = jnp.asarray(params["W3"], jnp.float32)
    b3 = jnp.asarray(params["b3"], jnp.float32)

    D_hid, inpn = W1.shape
    outn = W3.shape[0]
    assert inpn == 2, "forward() builds inputs = [t, kappa*ones] -> inpn must be 2"

    if compute_dtype is None:
        compute_dtype = _default_compute_dtype()
    if mxu_dtype is None:
        mxu_dtype = compute_dtype

    # Fold kappa into an effective first-layer bias; layer 1 then only needs t.
    w1t = W1[:, 0:1].astype(compute_dtype)                          # (D_hid, 1)
    b1_eff = (b1 + kappa * W1[:, 1]).reshape(D_hid, 1).astype(compute_dtype)
    b2c = b2.reshape(D_hid, 1)                                      # f32
    b3c = b3.reshape(outn, 1)                                       # f32
    w2c = W2.astype(mxu_dtype)
    w3c = W3.astype(mxu_dtype)

    x = t.reshape(1, N)                                             # batch on lanes, f32

    # ---- batch-tile (grid-step) size -------------------------------------
    # Per-element work is tiny (~64 tanh + ~2.3 Kflop), so large tiles are
    # needed to amortize the ~0.35 us fixed per-grid-step overhead; the tile
    # is capped at ~ceil(N/4) so the grid keeps >= 4 steps at large N and
    # both v7x TensorCores get work under dimension_semantics=("parallel",).
    if block_cols is None:
        if N <= 1024:
            block_cols = N                       # single tiny tile
        else:
            preferred = (16384 if jnp.dtype(compute_dtype) == jnp.dtype(jnp.bfloat16)
                         else 8192)
            per_step = _round_up(pl.cdiv(N, 4), 512)
            block_cols = max(512, min(preferred, per_step))
    else:
        block_cols = int(block_cols)
        if block_cols >= N:
            block_cols = N
        else:
            block_cols = max(128, (block_cols // 128) * 128)  # 128-aligned tiles

    # Lane sub-chunk width inside the kernel: keeps inter-layer temporaries
    # at vreg scale instead of (D_hid, block_cols) VMEM round-trips.
    if block_cols % 512 == 0:
        chunk = 512
    elif block_cols % 256 == 0:
        chunk = 256
    elif block_cols % 128 == 0:
        chunk = 128
    else:
        chunk = block_cols                       # small / unaligned single tile
    n_chunks = block_cols // chunk

    grid = (pl.cdiv(N, block_cols),)

    # Weights/biases are tiny -> full-array blocks, constant across the grid
    # (VMEM-resident; per-step I/O is just the t tile + output tile).
    full = lambda a: pl.BlockSpec(a.shape, lambda i: (0, 0))

    kernel = functools.partial(_hdnn_kernel, chunk=chunk, n_chunks=n_chunks)

    out = pl.pallas_call(
        kernel,
        out_shape=jax.ShapeDtypeStruct((outn, N), jnp.float32),
        grid_spec=pltpu.PrefetchScalarGridSpec(
            num_scalar_prefetch=0,
            grid=grid,
            in_specs=[
                pl.BlockSpec((1, block_cols), lambda i: (0, i)),    # t tile
                full(w1t), full(b1_eff),
                full(w2c), full(b2c),
                full(w3c), full(b3c),
            ],
            out_specs=pl.BlockSpec((outn, block_cols), lambda i: (0, i)),
        ),
        compiler_params=pltpu.CompilerParams(
            dimension_semantics=("parallel",),
            # Explicit scoped-VMEM budget: far above actual per-step use
            # (KB-scale), above v5e's 16 MiB scoped default, and within
            # v7x's 64 MiB physical VMEM.
            vmem_limit_bytes=32 * 1024 * 1024,
        ),
    )(x, w1t, b1_eff, w2c, b2c, w3c, b3c)

    # Match torch return: list of per-output (N, 1) arrays; rows of the
    # (outn, N) result are contiguous -> no strided column gather here.
    return [out[i].reshape(-1, 1) for i in range(outn)]


def init_params(key, inpn, outn, D_hid):
    """Deterministic init mirroring nn.Linear default (U(-1/sqrt(fan_in), +))."""
    ks = jax.random.split(key, 6)

    def lin(kw, kb, fan_in, fan_out):
        bound = 1.0 / jnp.sqrt(fan_in)
        w = jax.random.uniform(kw, (fan_out, fan_in), jnp.float32, -bound, bound)
        b = jax.random.uniform(kb, (fan_out,), jnp.float32, -bound, bound)
        return w, b

    W1, b1 = lin(ks[0], ks[1], inpn, D_hid)
    W2, b2 = lin(ks[2], ks[3], D_hid, D_hid)
    W3, b3 = lin(ks[4], ks[5], D_hid, outn)
    return {"W1": W1, "b1": b1, "W2": W2, "b2": b2, "W3": W3, "b3": b3}


def _reference(t, kappa, params):
    """Plain-JAX reference of the torch forward (actF = tanh)."""
    inputs = jnp.concatenate([t, jnp.ones_like(t) * kappa], axis=1)
    h = jnp.tanh(inputs @ params["W1"].T + params["b1"])
    h = jnp.tanh(h @ params["W2"].T + params["b2"])
    r = h @ params["W3"].T + params["b3"]
    return [r[:, i].reshape(-1, 1) for i in range(r.shape[1])]


if __name__ == "__main__":
    # Small shapes consistent with the module: t is (N, 1), inpn = 2 (t ++ kappa),
    # D_hid = 32 hidden units, outn = 2 outputs.
    N, inpn, D_hid, outn = 8, 2, 32, 2
    kappa = 0.5

    key = jax.random.PRNGKey(0)
    k_t, k_p = jax.random.split(key)
    t = jax.random.uniform(k_t, (N, 1), jnp.float32, 0.0, 1.0)
    params = init_params(k_p, inpn, outn, D_hid)

    refs = _reference(t, kappa, params)

    # 1) f32 compute path (exact match to the reference).
    outs = hdnn_forward(t, kappa, params, compute_dtype=jnp.float32)
    outs = [jax.block_until_ready(o) for o in outs]
    for o, r in zip(outs, refs):
        assert o.shape == r.shape == (N, 1)
        assert jnp.allclose(o, r, atol=1e-5, rtol=1e-5), (o, r)

    # 2) bf16 compute path (the v6e/v7x fast path; also runs on v5e, just slower).
    outs_bf = hdnn_forward(t, kappa, params, compute_dtype=jnp.bfloat16)
    outs_bf = [jax.block_until_ready(o) for o in outs_bf]
    for o, r in zip(outs_bf, refs):
        assert o.shape == (N, 1)
        assert jnp.allclose(o, r, atol=3e-2, rtol=0.0), (o, r)

    # 3) Multi-step grid with a partial last tile (exercises the tiled path).
    N2 = 300
    t2 = jax.random.uniform(jax.random.PRNGKey(1), (N2, 1), jnp.float32, 0.0, 1.0)
    refs2 = _reference(t2, kappa, params)
    outs2 = hdnn_forward(t2, kappa, params, block_cols=128,
                         compute_dtype=jnp.float32)
    outs2 = [jax.block_until_ready(o) for o in outs2]
    for o, r in zip(outs2, refs2):
        assert o.shape == r.shape == (N2, 1)
        assert jnp.allclose(o, r, atol=1e-5, rtol=1e-5), (o, r)

    # 4) Auto tile selection at larger N: multi-step grid, multi-chunk inner
    #    loop (block_cols=1024, chunk=512) and a partial last tile.
    N3 = 3000
    t3 = jax.random.uniform(jax.random.PRNGKey(2), (N3, 1), jnp.float32, 0.0, 1.0)
    refs3 = _reference(t3, kappa, params)
    outs3 = hdnn_forward(t3, kappa, params, compute_dtype=jnp.float32)
    outs3 = [jax.block_until_ready(o) for o in outs3]
    for o, r in zip(outs3, refs3):
        assert o.shape == r.shape == (N3, 1)
        assert jnp.allclose(o, r, atol=1e-5, rtol=1e-5), (o, r)

    print("KERNEL_OK")
</pallas_src>

<mosaic_0001>
module attributes {stable_mosaic.version = 11 : i64} {
  func.func @_hdnn_kernel(%arg0: i32, %arg1: memref<1x8xf32, #tpu.memory_space<vmem>>, %arg2: memref<32x1xf32, #tpu.memory_space<vmem>>, %arg3: memref<32x1xf32, #tpu.memory_space<vmem>>, %arg4: memref<32x32xf32, #tpu.memory_space<vmem>>, %arg5: memref<32x1xf32, #tpu.memory_space<vmem>>, %arg6: memref<2x32xf32, #tpu.memory_space<vmem>>, %arg7: memref<2x1xf32, #tpu.memory_space<vmem>>, %arg8: memref<2x8xf32, #tpu.memory_space<vmem>>) attributes {dimension_semantics = [#tpu.dimension_semantics<parallel>], iteration_bounds = array<i64: 1>, scalar_prefetch = 0 : i64, scratch_operands = 0 : i64, tpu.core_type = #tpu.core_type<tc>, window_params = [{transform_indices = @transform_0, window_bounds = array<i64: 1, 8>}, {pipeline_mode = #tpu.pipeline_mode<synchronous>, transform_indices = @transform_1, window_bounds = array<i64: 32, 1>}, {pipeline_mode = #tpu.pipeline_mode<synchronous>, transform_indices = @transform_2, window_bounds = array<i64: 32, 1>}, {pipeline_mode = #tpu.pipeline_mode<synchronous>, transform_indices = @transform_3, window_bounds = array<i64: 32, 32>}, {pipeline_mode = #tpu.pipeline_mode<synchronous>, transform_indices = @transform_4, window_bounds = array<i64: 32, 1>}, {pipeline_mode = #tpu.pipeline_mode<synchronous>, transform_indices = @transform_5, window_bounds = array<i64: 2, 32>}, {pipeline_mode = #tpu.pipeline_mode<synchronous>, transform_indices = @transform_6, window_bounds = array<i64: 2, 1>}, {transform_indices = @transform_7, window_bounds = array<i64: 2, 8>}]} {
    %c0 = arith.constant 0 : index
    %c0_0 = arith.constant 0 : index
    %0 = vector.load %arg2[%c0, %c0_0] : memref<32x1xf32, #tpu.memory_space<vmem>>, vector<32x1xf32>
    %c0_1 = arith.constant 0 : index
    %c0_2 = arith.constant 0 : index
    %1 = vector.load %arg3[%c0_1, %c0_2] : memref<32x1xf32, #tpu.memory_space<vmem>>, vector<32x1xf32>
    %c0_3 = arith.constant 0 : index
    %c0_4 = arith.constant 0 : index
    %2 = vector.load %arg4[%c0_3, %c0_4] : memref<32x32xf32, #tpu.memory_space<vmem>>, vector<32x32xf32>
    %c0_5 = arith.constant 0 : index
    %c0_6 = arith.constant 0 : index
    %3 = vector.load %arg5[%c0_5, %c0_6] : memref<32x1xf32, #tpu.memory_space<vmem>>, vector<32x1xf32>
    %c0_7 = arith.constant 0 : index
    %c0_8 = arith.constant 0 : index
    %4 = vector.load %arg6[%c0_7, %c0_8] : memref<2x32xf32, #tpu.memory_space<vmem>>, vector<2x32xf32>
    %c0_9 = arith.constant 0 : index
    %c0_10 = arith.constant 0 : index
    %5 = vector.load %arg7[%c0_9, %c0_10] : memref<2x1xf32, #tpu.memory_space<vmem>>, vector<2x1xf32>
    %c0_11 = arith.constant 0 : index
    %c0_12 = arith.constant 0 : index
    %6 = vector.load %arg1[%c0_11, %c0_12] : memref<1x8xf32, #tpu.memory_space<vmem>>, vector<1x8xf32>
    %7 = vector.broadcast %0 : vector<32x1xf32> to vector<32x8xf32>
    %8 = vector.broadcast %6 : vector<1x8xf32> to vector<32x8xf32>
    %9 = arith.mulf %7, %8 : vector<32x8xf32>
    %10 = vector.broadcast %1 : vector<32x1xf32> to vector<32x8xf32>
    %11 = arith.addf %9, %10 : vector<32x8xf32>
    %12 = math.tanh %11 : vector<32x8xf32>
    %cst = arith.constant dense<0.000000e+00> : vector<32x8xf32>
    %13 = tpu.matmul %2, %12, %cst {dimension_numbers = #tpu.dot_dimension_numbers<[1], [0], [0], [1], [0, 0, 1, 1], [], []>} : vector<32x32xf32>, vector<32x8xf32>, vector<32x8xf32> -> vector<32x8xf32>
    %14 = vector.broadcast %3 : vector<32x1xf32> to vector<32x8xf32>
    %15 = arith.addf %13, %14 : vector<32x8xf32>
    %16 = math.tanh %15 : vector<32x8xf32>
    %cst_13 = arith.constant dense<0.000000e+00> : vector<2x8xf32>
    %17 = tpu.matmul %4, %16, %cst_13 {dimension_numbers = #tpu.dot_dimension_numbers<[1], [0], [0], [1], [0, 0, 1, 1], [], []>} : vector<2x32xf32>, vector<32x8xf32>, vector<2x8xf32> -> vector<2x8xf32>
    %18 = vector.broadcast %5 : vector<2x1xf32> to vector<2x8xf32>
    %19 = arith.addf %17, %18 : vector<2x8xf32>
    %c0_14 = arith.constant 0 : index
    %c0_15 = arith.constant 0 : index
    %20 = vector.load %arg8[%c0_14, %c0_15] : memref<2x8xf32, #tpu.memory_space<vmem>>, vector<2x8xf32>
    tpu.vector_store %arg8[%c0_14, %c0_15], %19 {strides = array<i32>} : memref<2x8xf32, #tpu.memory_space<vmem>>, vector<2x8xf32>,
    return
  }
  func.func @transform_0(%arg0: i32) -> (i32, i32) {
    %c0_i32 = arith.constant 0 : i32
    %c0_i32_0 = arith.constant 0 : i32
    return %c0_i32, %arg0 : i32, i32
  }
  func.func @transform_1(%arg0: i32) -> (i32, i32) {
    %c0_i32 = arith.constant 0 : i32
    %c0_i32_0 = arith.constant 0 : i32
    %c0_i32_1 = arith.constant 0 : i32
    return %c0_i32, %c0_i32_0 : i32, i32
  }
  func.func @transform_2(%arg0: i32) -> (i32, i32) {
    %c0_i32 = arith.constant 0 : i32
    %c0_i32_0 = arith.constant 0 : i32
    %c0_i32_1 = arith.constant 0 : i32
    return %c0_i32, %c0_i32_0 : i32, i32
  }
  func.func @transform_3(%arg0: i32) -> (i32, i32) {
    %c0_i32 = arith.constant 0 : i32
    %c0_i32_0 = arith.constant 0 : i32
    %c0_i32_1 = arith.constant 0 : i32
    return %c0_i32, %c0_i32_0 : i32, i32
  }
  func.func @transform_4(%arg0: i32) -> (i32, i32) {
    %c0_i32 = arith.constant 0 : i32
    %c0_i32_0 = arith.constant 0 : i32
    %c0_i32_1 = arith.constant 0 : i32
    return %c0_i32, %c0_i32_0 : i32, i32
  }
  func.func @transform_5(%arg0: i32) -> (i32, i32) {
    %c0_i32 = arith.constant 0 : i32
    %c0_i32_0 = arith.constant 0 : i32
    %c0_i32_1 = arith.constant 0 : i32
    return %c0_i32, %c0_i32_0 : i32, i32
  }
  func.func @transform_6(%arg0: i32) -> (i32, i32) {
    %c0_i32 = arith.constant 0 : i32
    %c0_i32_0 = arith.constant 0 : i32
    %c0_i32_1 = arith.constant 0 : i32
    return %c0_i32, %c0_i32_0 : i32, i32
  }
  func.func @transform_7(%arg0: i32) -> (i32, i32) {
    %c0_i32 = arith.constant 0 : i32
    %c0_i32_0 = arith.constant 0 : i32
    return %c0_i32, %arg0 : i32, i32
  }
}

</mosaic_0001>

<llo_original>
// kernel: tpu_custom_call.1
$region0: #{tpu_custom_call.1}
  #allocation0 [shape = 'u32[]', space=smem, size = 0x4, offset = 0x4, fixed_abs, tag = 'smem constant byte address 0x4 - core index']
  #allocation1 [shape = 'u32[144,128]{1,0:T(1,128)}', space=vmem, size = 0x12000, scoped, tag = 'internal scratch']
  %s0 = inlined_call_operand.vmem [shape: f32[1,8], index: 0, kind: input, shape index: {}]
  %s1 = inlined_call_operand.vmem [shape: f32[32,1], index: 1, kind: input, shape index: {}]
  %s2 = inlined_call_operand.vmem [shape: f32[32,1], index: 2, kind: input, shape index: {}]
  %s3 = inlined_call_operand.vmem [shape: f32[32,32], index: 3, kind: input, shape index: {}]
  %s4 = inlined_call_operand.vmem [shape: f32[32,1], index: 4, kind: input, shape index: {}]
  %s5 = inlined_call_operand.vmem [shape: f32[2,32], index: 5, kind: input, shape index: {}]
  %s6 = inlined_call_operand.vmem [shape: f32[2,1], index: 6, kind: input, shape index: {}]
  %s7 = inlined_call_operand.hbm [shape: f32[2,8], index: 7, kind: output, shape index: {}]
  %s8 = sld [smem:[#allocation0]]
  $region38: #{tpu_custom_call.1} parent=0
    _
  %s10 = ssub.s32 1, %s8
  %s11 = scalar_select 0, %s10, %s8
  $region1: #{tpu_custom_call.1} parent=0
    #allocation2 [shape = 'u8[1024]{0}', space=vmem, size = 0x400, scoped, tag = 'output window, operand 0, single buffered']
    #allocation3 [shape = 's32[1]{0}', space=sflag, size = 0x4, scoped, tag = 'scoped memory for tpu_custom_call.1']
    %12 = vsyncpa [#allocation3], 0
    // Predicated region
    $region2: #{tpu_custom_call.1} parent=1 // pred_check
      _
    $region3: #{tpu_custom_call.1} parent=1 // pred_check_branch
      %14 = sbr.rel (0) target = $region5
    $region4: #{tpu_custom_call.1} parent=1 // pred_region
      _
    $region5: #{tpu_custom_call.1} parent=1 // pred_fallthru
      _
    // Predicated region
    $region6: #{tpu_custom_call.1} parent=1 // pred_check
      _
    $region7: #{tpu_custom_call.1} parent=1 // pred_check_branch
      %16 = sbr.rel (0) target = $region9
    $region8: #{tpu_custom_call.1} parent=1 // pred_region
      _
    $region9: #{tpu_custom_call.1} parent=1 // pred_fallthru
      _
    // Predicated region
    $region10: #{tpu_custom_call.1} parent=1 // pred_check
      _
    $region11: #{tpu_custom_call.1} parent=1 // pred_check_branch
      %18 = sbr.rel (0) target = $region13
    $region12: #{tpu_custom_call.1} parent=1 // pred_region
      _
    $region13: #{tpu_custom_call.1} parent=1 // pred_fallthru
      _
    // Predicated region
    $region14: #{tpu_custom_call.1} parent=1 // pred_check
      _
    $region15: #{tpu_custom_call.1} parent=1 // pred_check_branch
      %20 = sbr.rel (0) target = $region17
    $region16: #{tpu_custom_call.1} parent=1 // pred_region
      _
    $region17: #{tpu_custom_call.1} parent=1 // pred_fallthru
      _
    // Predicated region
    $region18: #{tpu_custom_call.1} parent=1 // pred_check
      _
    $region19: #{tpu_custom_call.1} parent=1 // pred_check_branch
      %22 = sbr.rel (0) target = $region21
    $region20: #{tpu_custom_call.1} parent=1 // pred_region
      _
    $region21: #{tpu_custom_call.1} parent=1 // pred_fallthru
      _
    // Predicated region
    $region22: #{tpu_custom_call.1} parent=1 // pred_check
      _
    $region23: #{tpu_custom_call.1} parent=1 // pred_check_branch
      %24 = sbr.rel (0) target = $region25
    $region24: #{tpu_custom_call.1} parent=1 // pred_region
      _
    $region25: #{tpu_custom_call.1} parent=1 // pred_fallthru
      _
    // Predicated region
    $region26: #{tpu_custom_call.1} parent=1 // pred_check
      _
    $region27: #{tpu_custom_call.1} parent=1 // pred_check_branch
      %26 = sbr.rel (0) target = $region29
    $region28: #{tpu_custom_call.1} parent=1 // pred_region
      _
    $region29: #{tpu_custom_call.1} parent=1 // pred_fallthru
      _
    %v27 = vld [vmem:[%s1] sm:$0xff]
    %v28 = vld [vmem:[%s1 + $0x8] sm:$0xff]
    %v29 = vld [vmem:[%s1 + $0x10] sm:$0xff]
    %v30 = vld [vmem:[%s1 + $0x18] sm:$0xff]
    %v31 = vld [vmem:[%s2] sm:$0xff]
    %v32 = vld [vmem:[%s2 + $0x8] sm:$0xff]
    %v33 = vld [vmem:[%s2 + $0x10] sm:$0xff]
    %v34 = vld [vmem:[%s2 + $0x18] sm:$0xff]
    %v35 = vld [vmem:[%s3] sm:$0xff]
    %v36 = vld [vmem:[%s3 + $0x8] sm:$0xff]
    %v37 = vld [vmem:[%s3 + $0x10] sm:$0xff]
    %v38 = vld [vmem:[%s3 + $0x18] sm:$0xff]
    %v39 = vld [vmem:[%s4] sm:$0xff]
    %v40 = vld [vmem:[%s4 + $0x8] sm:$0xff]
    %v41 = vld [vmem:[%s4 + $0x10] sm:$0xff]
    %v42 = vld [vmem:[%s4 + $0x18] sm:$0xff]
    %v43 = vld [vmem:[%s5] sm:$0x3]
    %v44 = vld [vmem:[%s6] sm:$0x3]
    %v45 = vld [vmem:[%s0] sm:$0x1]
    %47 = vset.pattern.permute.xlu0 0
    %48 = vperm.xlu0 %47, %v27
    %v49 = vpop.permute.xlu0 %48
    %52 = vset.pattern.permute.xlu0 0
    %53 = vperm.xlu0 %52, %v28
    %v54 = vpop.permute.xlu0 %53
    %57 = vset.pattern.permute.xlu0 0
    %58 = vperm.xlu0 %57, %v29
    %v59 = vpop.permute.xlu0 %58
    %62 = vset.pattern.permute.xlu0 0
    %63 = vperm.xlu0 %62, %v30
    %v64 = vpop.permute.xlu0 %63
    %v67 = vlaneseq
    %v68 = vshrl.u32 %v67, 7
    %v69 = vsub.s32 0, %v68
    %v70 = vrot.slane %v45, %v69
    %v72 = vmul.f32 %v49, %v70
    %v73 = vmul.f32 %v54, %v70
    %v74 = vmul.f32 %v59, %v70
    %v75 = vmul.f32 %v64, %v70
    %77 = vset.pattern.permute.xlu0 0
    %78 = vperm.xlu0 %77, %v31
    %v79 = vpop.permute.xlu0 %78
    %82 = vset.pattern.permute.xlu0 0
    %83 = vperm.xlu0 %82, %v32
    %v84 = vpop.permute.xlu0 %83
    %87 = vset.pattern.permute.xlu0 0
    %88 = vperm.xlu0 %87, %v33
    %v89 = vpop.permute.xlu0 %88
    %92 = vset.pattern.permute.xlu0 0
    %93 = vperm.xlu0 %92, %v34
    %v94 = vpop.permute.xlu0 %93
    %v96 = vadd.f32 %v72, %v79
    %v97 = vadd.f32 %v73, %v84
    %v98 = vadd.f32 %v74, %v89
    %v99 = vadd.f32 %v75, %v94
    %v100 = vtanh.pop %v96
    %v101 = vtanh.pop %v97
    %v102 = vtanh.pop %v98
    %v103 = vtanh.pop %v99
    %105 = vset.pattern.permute.xlu0 0
    %106 = vperm.xlu0 %105, %v39
    %v107 = vpop.permute.xlu0 %106
    %110 = vset.pattern.permute.xlu0 0
    %111 = vperm.xlu0 %110, %v40
    %v112 = vpop.permute.xlu0 %111
    %115 = vset.pattern.permute.xlu0 0
    %116 = vperm.xlu0 %115, %v41
    %v117 = vpop.permute.xlu0 %116
    %120 = vset.pattern.permute.xlu0 0
    %121 = vperm.xlu0 %120, %v42
    %v122 = vpop.permute.xlu0 %121
    %vm124 = vcmask 261120
    %v126 = vsel %vm124, %v35, 0
    %v129 = vsel %vm124, %v36, 0
    %v132 = vsel %vm124, %v37, 0
    %v135 = vsel %vm124, %v38, 0
    %137 = vmatprep.subr.mxu0 0.0
    %138 = vmatpush1.msra.mxu0 0.0
    %139 = vmatprep.subr.mxu0 0.0
    %140 = vmatpush1.msra.mxu0 0.0
    %141 = vmatprep.subr.mxu0 0.0
    %142 = vmatpush1.msra.mxu0 0.0
    %143 = vmatprep.subr.mxu0 0.0
    %144 = vmatpush1.msra.mxu0 0.0
    %145 = vmatprep.subr.mxu0 0.0
    %146 = vmatpush1.msra.mxu0 0.0
    %147 = vmatprep.subr.mxu0 0.0
    %148 = vmatpush1.msra.mxu0 0.0
    %149 = vmatprep.subr.mxu0 0.0
    %150 = vmatpush1.msra.mxu0 0.0
    %151 = vmatprep.subr.mxu0 0.0
    %152 = vmatpush1.msra.mxu0 0.0
    %153 = vmatprep.subr.mxu0 0.0
    %154 = vmatpush1.msra.mxu0 0.0
    %155 = vmatprep.subr.mxu0 0.0
    %156 = vmatpush1.msra.mxu0 0.0
    %157 = vmatprep.subr.mxu0 0.0
    %158 = vmatpush1.msra.mxu0 0.0
    %159 = vmatprep.subr.mxu0 0.0
    %160 = vmatpush1.msra.mxu0 0.0
    %161 = vmatprep.subr.mxu0 0.0
    %162 = vmatpush1.msra.mxu0 %v103
    %163 = vmatprep.subr.mxu0 0.0
    %164 = vmatpush1.msra.mxu0 %v102
    %165 = vmatprep.subr.mxu0 0.0
    %166 = vmatpush1.msra.mxu0 %v101
    %167 = vmatprep.subr.mxu0 0.0
    %168 = vmatpush1.msra.mxu0 %v100
    %169 = vmatprep.subr.mxu0 0.0
    %170 = vmatpush2.msra.mxu0 0.0
    %171 = vmatprep.subr.mxu0 0.0
    %172 = vmatpush2.msra.mxu0 0.0
    %173 = vmatprep.subr.mxu0 0.0
    %174 = vmatpush2.msra.mxu0 0.0
    %175 = vmatprep.subr.mxu0 0.0
    %176 = vmatpush2.msra.mxu0 0.0
    %177 = vmatprep.subr.mxu0 0.0
    %178 = vmatpush2.msra.mxu0 0.0
    %179 = vmatprep.subr.mxu0 0.0
    %180 = vmatpush2.msra.mxu0 0.0
    %181 = vmatprep.subr.mxu0 0.0
    %182 = vmatpush2.msra.mxu0 0.0
    %183 = vmatprep.subr.mxu0 0.0
    %184 = vmatpush2.msra.mxu0 0.0
    %185 = vmatprep.subr.mxu0 0.0
    %186 = vmatpush2.msra.mxu0 0.0
    %187 = vmatprep.subr.mxu0 0.0
    %188 = vmatpush2.msra.mxu0 0.0
    %189 = vmatprep.subr.mxu0 0.0
    %190 = vmatpush2.msra.mxu0 0.0
    %191 = vmatprep.subr.mxu0 0.0
    %192 = vmatpush2.msra.mxu0 0.0
    %193 = vmatprep.subr.mxu0 0.0
    %194 = vmatpush2.msra.mxu0 0.0
    %195 = vmatprep.subr.mxu0 0.0
    %196 = vmatpush2.msra.mxu0 0.0
    %197 = vmatprep.subr.mxu0 0.0
    %198 = vmatpush2.msra.mxu0 0.0
    %199 = vmatprep.subr.mxu0 0.0
    %200 = vmatpush2.msra.mxu0 0.0
    %201 = vmatprep.mubr.f32.mxu0 0.0
    %202 = vmatmul.mubr.f32.gmra.mxu0 %v126
    %v203 = vpop.f32.mrf.mxu0
    %v204 = vadd.f32 %v107, %v203
    %v205 = vpop.f32.mrf.mxu0
    %206 = vmatprep.mubr.f32.mxu0 0.0
    %207 = vmatmul.mubr.f32.gmra.mxu0 %v129
    %v208 = vpop.f32.mrf.mxu0
    %v209 = vadd.f32 %v112, %v208
    %v210 = vpop.f32.mrf.mxu0
    %211 = vmatprep.mubr.f32.mxu0 0.0
    %212 = vmatmul.mubr.f32.gmra.mxu0 %v132
    %v213 = vpop.f32.mrf.mxu0
    %v214 = vadd.f32 %v117, %v213
    %v215 = vpop.f32.mrf.mxu0
    %216 = vmatprep.mubr.f32.mxu0 0.0
    %217 = vmatmul.mubr.f32.gmra.mxu0 %v135
    %v218 = vpop.f32.mrf.mxu0
    %v219 = vadd.f32 %v122, %v218
    %v220 = vpop.f32.mrf.mxu0
    %221 = vdwg.mxu0
    %v222 = vtanh.pop %v204
    %v223 = vtanh.pop %v209
    %v224 = vtanh.pop %v214
    %v225 = vtanh.pop %v219
    %227 = vset.pattern.permute.xlu0 0
    %228 = vperm.xlu0 %227, %v44
    %v229 = vpop.permute.xlu0 %228
    %v232 = vsel %vm124, %v43, 0
    %234 = vmatprep.subr.mxu0 0.0
    %235 = vmatpush1.msra.mxu0 0.0
    %236 = vmatprep.subr.mxu0 0.0
    %237 = vmatpush1.msra.mxu0 0.0
    %238 = vmatprep.subr.mxu0 0.0
    %239 = vmatpush1.msra.mxu0 0.0
    %240 = vmatprep.subr.mxu0 0.0
    %241 = vmatpush1.msra.mxu0 0.0
    %242 = vmatprep.subr.mxu0 0.0
    %243 = vmatpush1.msra.mxu0 0.0
    %244 = vmatprep.subr.mxu0 0.0
    %245 = vmatpush1.msra.mxu0 0.0
    %246 = vmatprep.subr.mxu0 0.0
    %247 = vmatpush1.msra.mxu0 0.0
    %248 = vmatprep.subr.mxu0 0.0
    %249 = vmatpush1.msra.mxu0 0.0
    %250 = vmatprep.subr.mxu0 0.0
    %251 = vmatpush1.msra.mxu0 0.0
    %252 = vmatprep.subr.mxu0 0.0
    %253 = vmatpush1.msra.mxu0 0.0
    %254 = vmatprep.subr.mxu0 0.0
    %255 = vmatpush1.msra.mxu0 0.0
    %256 = vmatprep.subr.mxu0 0.0
    %257 = vmatpush1.msra.mxu0 0.0
    %258 = vmatprep.subr.mxu0 0.0
    %259 = vmatpush1.msra.mxu0 %v225
    %260 = vmatprep.subr.mxu0 0.0
    %261 = vmatpush1.msra.mxu0 %v224
    %262 = vmatprep.subr.mxu0 0.0
    %263 = vmatpush1.msra.mxu0 %v223
    %264 = vmatprep.subr.mxu0 0.0
    %265 = vmatpush1.msra.mxu0 %v222
    %266 = vmatprep.subr.mxu0 0.0
    %267 = vmatpush2.msra.mxu0 0.0
    %268 = vmatprep.subr.mxu0 0.0
    %269 = vmatpush2.msra.mxu0 0.0
    %270 = vmatprep.subr.mxu0 0.0
    %271 = vmatpush2.msra.mxu0 0.0
    %272 = vmatprep.subr.mxu0 0.0
    %273 = vmatpush2.msra.mxu0 0.0
    %274 = vmatprep.subr.mxu0 0.0
    %275 = vmatpush2.msra.mxu0 0.0
    %276 = vmatprep.subr.mxu0 0.0
    %277 = vmatpush2.msra.mxu0 0.0
    %278 = vmatprep.subr.mxu0 0.0
    %279 = vmatpush2.msra.mxu0 0.0
    %280 = vmatprep.subr.mxu0 0.0
    %281 = vmatpush2.msra.mxu0 0.0
    %282 = vmatprep.subr.mxu0 0.0
    %283 = vmatpush2.msra.mxu0 0.0
    %284 = vmatprep.subr.mxu0 0.0
    %285 = vmatpush2.msra.mxu0 0.0
    %286 = vmatprep.subr.mxu0 0.0
    %287 = vmatpush2.msra.mxu0 0.0
    %288 = vmatprep.subr.mxu0 0.0
    %289 = vmatpush2.msra.mxu0 0.0
    %290 = vmatprep.subr.mxu0 0.0
    %291 = vmatpush2.msra.mxu0 0.0
    %292 = vmatprep.subr.mxu0 0.0
    %293 = vmatpush2.msra.mxu0 0.0
    %294 = vmatprep.subr.mxu0 0.0
    %295 = vmatpush2.msra.mxu0 0.0
    %296 = vmatprep.subr.mxu0 0.0
    %297 = vmatpush2.msra.mxu0 0.0
    %298 = vmatprep.mubr.f32.mxu0 0.0
    %299 = vmatmul.mubr.f32.gmra.mxu0 %v232
    %v300 = vpop.f32.mrf.mxu0
    %v301 = vadd.f32 %v229, %v300
    %v302 = vpop.f32.mrf.mxu0
    %303 = vdwg.mxu0
    %vm304 = vcmask 58368
    %305 = vst.msk [vmem:[#allocation2] sm:$0x3] %vm304, %v301
    // Predicated region
    $region30: #{tpu_custom_call.1} parent=1 // pred_check
      _
    $region31: #{tpu_custom_call.1} parent=1 // pred_check_branch
      %307 = sbr.rel (0) target = $region33
    $region32: #{tpu_custom_call.1} parent=1 // pred_region
      %s309 = ssub.s32 32, 32
      %310 = vsyncadd [#allocation3], %s309
      %s312 = sshll.u32 [#allocation2], 4
      %s313 = int_to_ptr.vmem [resolvable:$true] %s312
      %315 = dma.vmem_to_hbm [thread:$0]  %s313, 32, %s7, [#allocation3]
    $region33: #{tpu_custom_call.1} parent=1 // pred_fallthru
      _
    // Predicated region
    $region34: #{tpu_custom_call.1} parent=1 // pred_check
      _
    $region35: #{tpu_custom_call.1} parent=1 // pred_check_branch
      %317 = sbr.rel (0) target = $region37
    $region36: #{tpu_custom_call.1} parent=1 // pred_region
      %318 = dma.done [#allocation3], 32
    $region37: #{tpu_custom_call.1} parent=1 // pred_fallthru
      _
    %319 = vsyncpa [#allocation3], 1

</llo_original>
